<compile_context>
chip_gen: v6e
topology: v6e:2x2x1
jax: 0.10.0
libtpu: 0.0.40
codegen_flags: <defaults>
</compile_context>

<pallas_src>
import functools

import jax
import jax.numpy as jnp
from jax.experimental import pallas as pl
from jax.experimental.pallas import tpu as pltpu


def _integer_pow(m, gamma):
    """m ** gamma with repeated multiplication when gamma is a non-negative int.

    Avoids the exp(log(x)) lowering of float pow (saves the single EUP slot)
    and the NaN edge case when m is a tiny negative rounding artifact.
    """
    g = float(gamma)
    if g.is_integer() and g >= 0:
        n = int(g)
        if n == 0:
            return jnp.ones_like(m)
        out = None
        base = m
        while n:
            if n & 1:
                out = base if out is None else out * base
            n >>= 1
            if n:
                base = base * base
        return out
    return m ** gamma  # non-integer gamma: fall back to float pow


def _focal_loss_kernel(x_ref, t_ref, out_ref, *, alpha, gamma):
    x = x_ref[...].astype(jnp.float32)
    t = t_ref[...].astype(jnp.float32)

    # Single shared transcendental: e = exp(-|x|) in (0, 1].
    e = jnp.exp(-jnp.abs(x))
    inv_1pe = pl.reciprocal(1.0 + e, approx=True)        # EUP vrcp
    p = jnp.where(x >= 0.0, inv_1pe, e * inv_1pe)        # sigmoid(x)

    # Numerically stable BCE-with-logits (reduction='none'), reusing e:
    #   max(x, 0) - x * t + log1p(exp(-|x|))
    ce = jnp.maximum(x, 0.0) - x * t + jnp.log1p(e)

    # Modulating factor (1 - p_t) ** gamma, integer-power path for gamma=3.
    p_t = p * t + (1.0 - p) * (1.0 - t)
    mod = _integer_pow(1.0 - p_t, gamma)
    loss = ce * mod

    # Alpha weighting (torchvision applies it only for alpha >= 0).
    if alpha >= 0:
        loss = (alpha * t + (1.0 - alpha) * (1.0 - t)) * loss

    # Vreg-shaped partial sum: reduce over the leading (vreg-slab) axis only,
    # which lowers to pure VPU elementwise adds -- no per-step XLU reduce.
    rows, cols = loss.shape
    partial = loss.reshape(rows // 8, 8, cols).sum(axis=0)   # (8, cols)
    out_ref[...] = partial[None, :, :]


def focal_loss(inputs, targets, *, alpha=0.3, gamma=3, reduction="mean",
               cols=512, target_block_bytes=2 * 1024 * 1024):
    """Sigmoid focal loss over an arbitrary-shaped float tensor."""
    assert inputs.shape == targets.shape
    total = int(inputs.size)

    xr = jnp.ravel(inputs)
    tr = jnp.ravel(targets)

    # Pad flattened inputs up to whole (8, cols) vreg-aligned slabs, then up to
    # whole blocks.  Pad value (x=-1e4, t=0) contributes exactly zero loss.
    slab = 8 * cols
    n_rows = ((total + slab - 1) // slab) * slab // cols

    block_rows = max(8, (target_block_bytes // (cols * 4)) // 8 * 8)
    block_rows = min(block_rows, n_rows)
    n_rows = ((n_rows + block_rows - 1) // block_rows) * block_rows
    padded = n_rows * cols
    n_blocks = n_rows // block_rows

    pad = padded - total
    if pad:
        xr = jnp.concatenate([xr, jnp.full((pad,), -1e4, xr.dtype)])
        tr = jnp.concatenate([tr, jnp.zeros((pad,), tr.dtype)])
    x2 = xr.reshape(n_rows, cols)
    t2 = tr.reshape(n_rows, cols)

    kernel = functools.partial(_focal_loss_kernel, alpha=float(alpha),
                               gamma=gamma)

    in_bytes = (x2.size * x2.dtype.itemsize) + (t2.size * t2.dtype.itemsize)
    out_bytes = n_blocks * 8 * cols * 4
    cost = pl.CostEstimate(
        flops=20 * padded,
        transcendentals=3 * padded,      # exp, log1p, approx reciprocal
        bytes_accessed=in_bytes + out_bytes,
    )

    partials = pl.pallas_call(
        kernel,
        out_shape=jax.ShapeDtypeStruct((n_blocks, 8, cols), jnp.float32),
        grid_spec=pltpu.PrefetchScalarGridSpec(
            num_scalar_prefetch=0,
            grid=(n_blocks,),
            in_specs=[
                pl.BlockSpec((block_rows, cols), lambda i: (i, 0)),
                pl.BlockSpec((block_rows, cols), lambda i: (i, 0)),
            ],
            out_specs=pl.BlockSpec((1, 8, cols), lambda i: (i, 0, 0)),
        ),
        compiler_params=pltpu.CompilerParams(
            # Each grid step owns its output block -> fully parallel; lets the
            # runtime shard across the 2 TensorCores on v7x.
            dimension_semantics=("parallel",),
        ),
        cost_estimate=cost,
    )(x2, t2)

    s = jnp.sum(partials)   # tiny final reduction (n_blocks * 8 * cols elems)
    if reduction == "mean":
        return s / jnp.float32(total)
    if reduction == "sum":
        return s
    # TODO(synk): reduction='none' (full per-element loss tensor) not implemented.
    raise NotImplementedError("reduction must be 'mean' or 'sum'")


def _focal_loss_ref(inputs, targets, alpha=0.3, gamma=3):
    """Pure-JAX reference matching torchvision.ops.sigmoid_focal_loss (mean)."""
    x = inputs.astype(jnp.float32)
    t = targets.astype(jnp.float32)
    p = jax.nn.sigmoid(x)
    ce = jnp.maximum(x, 0.0) - x * t + jnp.log1p(jnp.exp(-jnp.abs(x)))
    p_t = p * t + (1.0 - p) * (1.0 - t)
    loss = ce * (1.0 - p_t) ** gamma
    if alpha >= 0:
        loss = (alpha * t + (1.0 - alpha) * (1.0 - t)) * loss
    return jnp.mean(loss)


if __name__ == "__main__":
    key = jax.random.PRNGKey(0)
    k1, k2, k3, k4 = jax.random.split(key, 4)

    # Case 1: lane-aligned shape, single grid block.
    x1 = jax.random.normal(k1, (16, 256), dtype=jnp.float32) * 2.0
    t1 = (jax.random.uniform(k2, (16, 256)) > 0.5).astype(jnp.float32)
    got1 = jax.block_until_ready(focal_loss(x1, t1, alpha=0.3, gamma=3))
    ref1 = jax.block_until_ready(_focal_loss_ref(x1, t1, 0.3, 3))
    assert jnp.allclose(got1, ref1, rtol=2e-3, atol=1e-6), (got1, ref1)

    # Case 2: ragged shape (exercises the zero-loss padding path) and a small
    # block size so the grid has multiple parallel blocks.
    x2 = jax.random.normal(k3, (16, 257), dtype=jnp.float32) * 2.0
    t2 = (jax.random.uniform(k4, (16, 257)) > 0.5).astype(jnp.float32)
    got2 = jax.block_until_ready(
        focal_loss(x2, t2, alpha=0.3, gamma=3, target_block_bytes=8 * 512 * 4))
    ref2 = jax.block_until_ready(_focal_loss_ref(x2, t2, 0.3, 3))
    assert jnp.allclose(got2, ref2, rtol=2e-3, atol=1e-6), (got2, ref2)

    print("KERNEL_OK")
</pallas_src>

<mosaic_0001>
module attributes {stable_mosaic.version = 11 : i64} {
  func.func @_focal_loss_kernel(%arg0: i32, %arg1: memref<8x512xf32, #tpu.memory_space<vmem>>, %arg2: memref<8x512xf32, #tpu.memory_space<vmem>>, %arg3: memref<1x8x512xf32, #tpu.memory_space<vmem>>) attributes {dimension_semantics = [#tpu.dimension_semantics<parallel>], iteration_bounds = array<i64: 1>, scalar_prefetch = 0 : i64, scratch_operands = 0 : i64, tpu.core_type = #tpu.core_type<tc>, window_params = [{transform_indices = @transform_0, window_bounds = array<i64: 8, 512>}, {transform_indices = @transform_1, window_bounds = array<i64: 8, 512>}, {transform_indices = @transform_2, window_bounds = array<i64: 1, 8, 512>}]} {
    %c0 = arith.constant 0 : index
    %c0_0 = arith.constant 0 : index
    %0 = vector.load %arg1[%c0, %c0_0] : memref<8x512xf32, #tpu.memory_space<vmem>>, vector<8x512xf32>
    %c0_1 = arith.constant 0 : index
    %c0_2 = arith.constant 0 : index
    %1 = vector.load %arg2[%c0_1, %c0_2] : memref<8x512xf32, #tpu.memory_space<vmem>>, vector<8x512xf32>
    %2 = math.absf %0 : vector<8x512xf32>
    %cst = arith.constant 0.000000e+00 : f32
    %3 = vector.broadcast %cst : f32 to vector<8x512xf32>
    %4 = arith.subf %3, %2 : vector<8x512xf32>
    %5 = math.exp %4 : vector<8x512xf32>
    %cst_3 = arith.constant 1.000000e+00 : f32
    %6 = vector.broadcast %cst_3 : f32 to vector<8x512xf32>
    %7 = arith.addf %6, %5 : vector<8x512xf32>
    %8 = tpu.reciprocal %7 {approx = true} : vector<8x512xf32> -> vector<8x512xf32>
    %cst_4 = arith.constant 0.000000e+00 : f32
    %9 = vector.broadcast %cst_4 : f32 to vector<8x512xf32>
    %10 = arith.cmpf oge, %0, %9 : vector<8x512xf32>
    %11 = arith.mulf %5, %8 : vector<8x512xf32>
    %12 = arith.select %10, %8, %11 : vector<8x512xi1>, vector<8x512xf32>
    %cst_5 = arith.constant 0.000000e+00 : f32
    %13 = vector.broadcast %cst_5 : f32 to vector<8x512xf32>
    %14 = arith.maximumf %0, %13 : vector<8x512xf32>
    %15 = arith.mulf %0, %1 : vector<8x512xf32>
    %16 = arith.subf %14, %15 : vector<8x512xf32>
    %17 = math.log1p %5 : vector<8x512xf32>
    %18 = arith.addf %16, %17 : vector<8x512xf32>
    %19 = arith.mulf %12, %1 : vector<8x512xf32>
    %cst_6 = arith.constant 1.000000e+00 : f32
    %20 = vector.broadcast %cst_6 : f32 to vector<8x512xf32>
    %21 = arith.subf %20, %12 : vector<8x512xf32>
    %cst_7 = arith.constant 1.000000e+00 : f32
    %22 = vector.broadcast %cst_7 : f32 to vector<8x512xf32>
    %23 = arith.subf %22, %1 : vector<8x512xf32>
    %24 = arith.mulf %21, %23 : vector<8x512xf32>
    %25 = arith.addf %19, %24 : vector<8x512xf32>
    %cst_8 = arith.constant 1.000000e+00 : f32
    %26 = vector.broadcast %cst_8 : f32 to vector<8x512xf32>
    %27 = arith.subf %26, %25 : vector<8x512xf32>
    %28 = arith.mulf %27, %27 : vector<8x512xf32>
    %29 = arith.mulf %27, %28 : vector<8x512xf32>
    %30 = arith.mulf %18, %29 : vector<8x512xf32>
    %cst_9 = arith.constant 3.000000e-01 : f32
    %31 = vector.broadcast %cst_9 : f32 to vector<8x512xf32>
    %32 = arith.mulf %31, %1 : vector<8x512xf32>
    %cst_10 = arith.constant 1.000000e+00 : f32
    %33 = vector.broadcast %cst_10 : f32 to vector<8x512xf32>
    %34 = arith.subf %33, %1 : vector<8x512xf32>
    %cst_11 = arith.constant 0.699999988 : f32
    %35 = vector.broadcast %cst_11 : f32 to vector<8x512xf32>
    %36 = arith.mulf %35, %34 : vector<8x512xf32>
    %37 = arith.addf %32, %36 : vector<8x512xf32>
    %38 = arith.mulf %37, %30 : vector<8x512xf32>
    %39 = vector.shape_cast %38 : vector<8x512xf32> to vector<1x8x512xf32>
    %cst_12 = arith.constant dense<0.000000e+00> : vector<8x512xf32>
    %40 = vector.multi_reduction <add>, %39, %cst_12 [0] : vector<1x8x512xf32> to vector<8x512xf32>
    %41 = vector.shape_cast %40 : vector<8x512xf32> to vector<1x8x512xf32>
    %c0_13 = arith.constant 0 : index
    %c0_14 = arith.constant 0 : index
    %c0_15 = arith.constant 0 : index
    %42 = vector.load %arg3[%c0_13, %c0_14, %c0_15] : memref<1x8x512xf32, #tpu.memory_space<vmem>>, vector<1x8x512xf32>
    tpu.vector_store %arg3[%c0_13, %c0_14, %c0_15], %41 {strides = array<i32>} : memref<1x8x512xf32, #tpu.memory_space<vmem>>, vector<1x8x512xf32>,
    return
  }
  func.func @transform_0(%arg0: i32) -> (i32, i32) {
    %c0_i32 = arith.constant 0 : i32
    %c0_i32_0 = arith.constant 0 : i32
    return %arg0, %c0_i32 : i32, i32
  }
  func.func @transform_1(%arg0: i32) -> (i32, i32) {
    %c0_i32 = arith.constant 0 : i32
    %c0_i32_0 = arith.constant 0 : i32
    return %arg0, %c0_i32 : i32, i32
  }
  func.func @transform_2(%arg0: i32) -> (i32, i32, i32) {
    %c0_i32 = arith.constant 0 : i32
    %c0_i32_0 = arith.constant 0 : i32
    %c0_i32_1 = arith.constant 0 : i32
    return %arg0, %c0_i32, %c0_i32_0 : i32, i32, i32
  }
}

</mosaic_0001>

<llo_original>
// kernel: tpu_custom_call.1
$region0: #{tpu_custom_call.1}
  #allocation0 [shape = 'u32[]', space=smem, size = 0x4, offset = 0x4, fixed_abs, tag = 'smem constant byte address 0x4 - core index']
  #allocation1 [shape = 'u32[144,128]{1,0:T(1,128)}', space=vmem, size = 0x12000, scoped, tag = 'internal scratch']
  %s0 = inlined_call_operand.hbm [shape: f32[8,512], index: 0, kind: input, shape index: {}]
  %s1 = inlined_call_operand.hbm [shape: f32[8,512], index: 1, kind: input, shape index: {}]
  %s2 = inlined_call_operand.hbm [shape: f32[1,8,512], index: 2, kind: output, shape index: {}]
  %s3 = sld [smem:[#allocation0]]
  $region26: #{tpu_custom_call.1} parent=0
    _
  %s5 = ssub.s32 1, %s3
  %s6 = scalar_select 0, %s5, %s3
  $region1: #{tpu_custom_call.1} parent=0
    #allocation2 [shape = 'u8[16384]{0}', space=vmem, size = 0x4000, scoped, tag = 'input window, operand 0, single buffered']
    #allocation3 [shape = 's32[1]{0}', space=sflag, size = 0x4, scoped, tag = 'scoped memory for tpu_custom_call.1']
    #allocation4 [shape = 's32[1]{0}', space=sflag, size = 0x4, scoped, tag = 'scoped memory for tpu_custom_call.1']
    #allocation5 [shape = 'u8[16384]{0}', space=vmem, size = 0x4000, scoped, tag = 'input window, operand 1, single buffered']
    #allocation6 [shape = 's32[1]{0}', space=sflag, size = 0x4, scoped, tag = 'scoped memory for tpu_custom_call.1']
    #allocation7 [shape = 'u8[16384]{0}', space=vmem, size = 0x4000, scoped, tag = 'output window, operand 0, single buffered']
    %7 = vsyncpa [#allocation3], 0
    %8 = vsyncpa [#allocation6], 0
    %9 = vsyncpa [#allocation4], 0
    // Predicated region
    $region2: #{tpu_custom_call.1} parent=1 // pred_check
      _
    $region3: #{tpu_custom_call.1} parent=1 // pred_check_branch
      %11 = sbr.rel (0) target = $region5
    $region4: #{tpu_custom_call.1} parent=1 // pred_region
      %s13 = ssub.s32 512, 512
      %14 = vsyncadd [#allocation3], %s13
      %s16 = sshll.u32 [#allocation2], 4
      %s17 = int_to_ptr.vmem [resolvable:$true] %s16
      %19 = dma.hbm_to_vmem [thread:$0]  %s0, 512, %s17, [#allocation3]
    $region5: #{tpu_custom_call.1} parent=1 // pred_fallthru
      _
    // Predicated region
    $region6: #{tpu_custom_call.1} parent=1 // pred_check
      _
    $region7: #{tpu_custom_call.1} parent=1 // pred_check_branch
      %21 = sbr.rel (0) target = $region9
    $region8: #{tpu_custom_call.1} parent=1 // pred_region
      %s23 = ssub.s32 512, 512
      %24 = vsyncadd [#allocation6], %s23
      %s26 = sshll.u32 [#allocation5], 4
      %s27 = int_to_ptr.vmem [resolvable:$true] %s26
      %29 = dma.hbm_to_vmem [thread:$0]  %s1, 512, %s27, [#allocation6]
    $region9: #{tpu_custom_call.1} parent=1 // pred_fallthru
      _
    // Predicated region
    $region10: #{tpu_custom_call.1} parent=1 // pred_check
      _
    $region11: #{tpu_custom_call.1} parent=1 // pred_check_branch
      %31 = sbr.rel (0) target = $region13
    $region12: #{tpu_custom_call.1} parent=1 // pred_region
      %32 = dma.done [#allocation3], 512
    $region13: #{tpu_custom_call.1} parent=1 // pred_fallthru
      _
    // Predicated region
    $region14: #{tpu_custom_call.1} parent=1 // pred_check
      _
    $region15: #{tpu_custom_call.1} parent=1 // pred_check_branch
      %34 = sbr.rel (0) target = $region17
    $region16: #{tpu_custom_call.1} parent=1 // pred_region
      %35 = dma.done [#allocation6], 512
    $region17: #{tpu_custom_call.1} parent=1 // pred_fallthru
      _
    %v36 = vld [vmem:[#allocation2] sm:$0xff]
    %v37 = vld [vmem:[#allocation2 + $0x8] sm:$0xff]
    %v38 = vld [vmem:[#allocation2 + $0x10] sm:$0xff]
    %v39 = vld [vmem:[#allocation2 + $0x18] sm:$0xff]
    %v40 = vld [vmem:[#allocation5] sm:$0xff]
    %v41 = vld [vmem:[#allocation5 + $0x8] sm:$0xff]
    %v42 = vld [vmem:[#allocation5 + $0x10] sm:$0xff]
    %v43 = vld [vmem:[#allocation5 + $0x18] sm:$0xff]
    %v44 = vand.u32 2147483647, %v36
    %v45 = vand.u32 2147483647, %v37
    %v46 = vand.u32 2147483647, %v38
    %v47 = vand.u32 2147483647, %v39
    %v48 = vsub.f32 0.0, %v44
    %v49 = vsub.f32 0.0, %v45
    %v50 = vsub.f32 0.0, %v46
    %v51 = vsub.f32 0.0, %v47
    %v52 = vmul.f32 %v48, 1.442695
    %v53 = vpow.pop %v52
    %v54 = vmul.f32 %v49, 1.442695
    %v55 = vpow.pop %v54
    %v56 = vmul.f32 %v50, 1.442695
    %v57 = vpow.pop %v56
    %v58 = vmul.f32 %v51, 1.442695
    %v59 = vpow.pop %v58
    %v60 = vadd.f32 %v53, 1.0
    %v61 = vadd.f32 %v55, 1.0
    %v62 = vadd.f32 %v57, 1.0
    %v63 = vadd.f32 %v59, 1.0
    %v64 = vrcp.pop %v60
    %v65 = vrcp.pop %v61
    %v66 = vrcp.pop %v62
    %v67 = vrcp.pop %v63
    %vm68 = vcmp.ge.f32.partialorder %v36, 0.0
    %vm69 = vcmp.ge.f32.partialorder %v37, 0.0
    %vm70 = vcmp.ge.f32.partialorder %v38, 0.0
    %vm71 = vcmp.ge.f32.partialorder %v39, 0.0
    %v72 = vmul.f32 %v53, %v64
    %v73 = vmul.f32 %v55, %v65
    %v74 = vmul.f32 %v57, %v66
    %v75 = vmul.f32 %v59, %v67
    %v76 = vsel %vm68, %v64, %v72
    %v77 = vsel %vm69, %v65, %v73
    %v78 = vsel %vm70, %v66, %v74
    %v79 = vsel %vm71, %v67, %v75
    %v80 = vmax.f32 %v36, 0.0
    %v81 = vmax.f32 %v37, 0.0
    %v82 = vmax.f32 %v38, 0.0
    %v83 = vmax.f32 %v39, 0.0
    %v84 = vmul.f32 %v36, %v40
    %v85 = vmul.f32 %v37, %v41
    %v86 = vmul.f32 %v38, %v42
    %v87 = vmul.f32 %v39, %v43
    %v88 = vsub.f32 %v80, %v84
    %v89 = vsub.f32 %v81, %v85
    %v90 = vsub.f32 %v82, %v86
    %v91 = vsub.f32 %v83, %v87
    %v92 = vadd.f32 %v53, 1.0
    %v93 = vlog2.pop %v92
    %v94 = vmul.f32 %v93, 0.6931472
    %v95 = vmul.f32 -0.5, %v53
    %v96 = vadd.f32 %v95, 1.0
    %v97 = vmul.f32 %v96, %v53
    %v98 = vand.u32 2147483647, %v53
    %vm99 = vcmp.lt.f32.partialorder %v98, 0.0004427343
    %v100 = vsel %vm99, %v97, %v94
    %v101 = vadd.f32 %v55, 1.0
    %v102 = vlog2.pop %v101
    %v103 = vmul.f32 %v102, 0.6931472
    %v104 = vmul.f32 -0.5, %v55
    %v105 = vadd.f32 %v104, 1.0
    %v106 = vmul.f32 %v105, %v55
    %v107 = vand.u32 2147483647, %v55
    %vm108 = vcmp.lt.f32.partialorder %v107, 0.0004427343
    %v109 = vsel %vm108, %v106, %v103
    %v110 = vadd.f32 %v57, 1.0
    %v111 = vlog2.pop %v110
    %v112 = vmul.f32 %v111, 0.6931472
    %v113 = vmul.f32 -0.5, %v57
    %v114 = vadd.f32 %v113, 1.0
    %v115 = vmul.f32 %v114, %v57
    %v116 = vand.u32 2147483647, %v57
    %vm117 = vcmp.lt.f32.partialorder %v116, 0.0004427343
    %v118 = vsel %vm117, %v115, %v112
    %v119 = vadd.f32 %v59, 1.0
    %v120 = vlog2.pop %v119
    %v121 = vmul.f32 %v120, 0.6931472
    %v122 = vmul.f32 -0.5, %v59
    %v123 = vadd.f32 %v122, 1.0
    %v124 = vmul.f32 %v123, %v59
    %v125 = vand.u32 2147483647, %v59
    %vm126 = vcmp.lt.f32.partialorder %v125, 0.0004427343
    %v127 = vsel %vm126, %v124, %v121
    %v128 = vadd.f32 %v88, %v100
    %v129 = vadd.f32 %v89, %v109
    %v130 = vadd.f32 %v90, %v118
    %v131 = vadd.f32 %v91, %v127
    %v132 = vmul.f32 %v76, %v40
    %v133 = vmul.f32 %v77, %v41
    %v134 = vmul.f32 %v78, %v42
    %v135 = vmul.f32 %v79, %v43
    %v136 = vsub.f32 1.0, %v76
    %v137 = vsub.f32 1.0, %v77
    %v138 = vsub.f32 1.0, %v78
    %v139 = vsub.f32 1.0, %v79
    %v140 = vsub.f32 1.0, %v40
    %v141 = vsub.f32 1.0, %v41
    %v142 = vsub.f32 1.0, %v42
    %v143 = vsub.f32 1.0, %v43
    %v144 = vmul.f32 %v136, %v140
    %v145 = vmul.f32 %v137, %v141
    %v146 = vmul.f32 %v138, %v142
    %v147 = vmul.f32 %v139, %v143
    %v148 = vadd.f32 %v132, %v144
    %v149 = vadd.f32 %v133, %v145
    %v150 = vadd.f32 %v134, %v146
    %v151 = vadd.f32 %v135, %v147
    %v152 = vsub.f32 1.0, %v148
    %v153 = vsub.f32 1.0, %v149
    %v154 = vsub.f32 1.0, %v150
    %v155 = vsub.f32 1.0, %v151
    %v156 = vmul.f32 %v152, %v152
    %v157 = vmul.f32 %v153, %v153
    %v158 = vmul.f32 %v154, %v154
    %v159 = vmul.f32 %v155, %v155
    %v160 = vmul.f32 %v152, %v156
    %v161 = vmul.f32 %v153, %v157
    %v162 = vmul.f32 %v154, %v158
    %v163 = vmul.f32 %v155, %v159
    %v164 = vmul.f32 %v128, %v160
    %v165 = vmul.f32 %v129, %v161
    %v166 = vmul.f32 %v130, %v162
    %v167 = vmul.f32 %v131, %v163
    %v168 = vmul.f32 %v40, 0.3
    %v169 = vmul.f32 %v41, 0.3
    %v170 = vmul.f32 %v42, 0.3
    %v171 = vmul.f32 %v43, 0.3
    %v172 = vmul.f32 %v140, 0.7
    %v173 = vmul.f32 %v141, 0.7
    %v174 = vmul.f32 %v142, 0.7
    %v175 = vmul.f32 %v143, 0.7
    %v176 = vadd.f32 %v168, %v172
    %v177 = vadd.f32 %v169, %v173
    %v178 = vadd.f32 %v170, %v174
    %v179 = vadd.f32 %v171, %v175
    %v180 = vmul.f32 %v176, %v164
    %v181 = vmul.f32 %v177, %v165
    %v182 = vmul.f32 %v178, %v166
    %v183 = vmul.f32 %v179, %v167
    %v184 = vadd.f32 %v180, 0.0
    %v185 = vadd.f32 %v181, 0.0
    %v186 = vadd.f32 %v182, 0.0
    %v187 = vadd.f32 %v183, 0.0
    %188 = vst [vmem:[#allocation7] sm:$0xff] %v184
    %189 = vst [vmem:[#allocation7 + $0x8] sm:$0xff] %v185
    %190 = vst [vmem:[#allocation7 + $0x10] sm:$0xff] %v186
    %191 = vst [vmem:[#allocation7 + $0x18] sm:$0xff] %v187
    // Predicated region
    $region18: #{tpu_custom_call.1} parent=1 // pred_check
      _
    $region19: #{tpu_custom_call.1} parent=1 // pred_check_branch
      %193 = sbr.rel (0) target = $region21
    $region20: #{tpu_custom_call.1} parent=1 // pred_region
      %s195 = ssub.s32 512, 512
      %196 = vsyncadd [#allocation4], %s195
      %s198 = sshll.u32 [#allocation7], 4
      %s199 = int_to_ptr.vmem [resolvable:$true] %s198
      %201 = dma.vmem_to_hbm [thread:$0]  %s199, 512, %s2, [#allocation4]
    $region21: #{tpu_custom_call.1} parent=1 // pred_fallthru
      _
    // Predicated region
    $region22: #{tpu_custom_call.1} parent=1 // pred_check
      _
    $region23: #{tpu_custom_call.1} parent=1 // pred_check_branch
      %203 = sbr.rel (0) target = $region25
    $region24: #{tpu_custom_call.1} parent=1 // pred_region
      %204 = dma.done [#allocation4], 512
    $region25: #{tpu_custom_call.1} parent=1 // pred_fallthru
      _
    %205 = vsyncpa [#allocation3], 1
    %206 = vsyncpa [#allocation6], 1
    %207 = vsyncpa [#allocation4], 1

</llo_original>
